<compile_context>
chip_gen: v6e
topology: v6e:2x2x1
jax: 0.10.0
libtpu: 0.0.40
codegen_flags: <defaults>
</compile_context>

<pallas_src>
import functools

import jax
import jax.numpy as jnp
from jax.experimental import pallas as pl
from jax.experimental.pallas import tpu as pltpu


# ----------------------------------------------------------------------------
# Config (stands in for cfg / field_info)
# ----------------------------------------------------------------------------
LATENT_DIM = 16
AGGREGATE = "concat"
HIDDEN_DIMS_FRACTOR = (0.5, 0.5)      # cur_dim -> cur_dim*0.5 -> that*0.5
DROPOUT_PROB = 0.1                    # eval mode -> identity
FIELD_VOCAB_SIZES = (50, 30, 20, 10)  # 4 sparse categorical fields
NUM_FIELDS = len(FIELD_VOCAB_SIZES)
BN_EPS = 1e-5

D0 = NUM_FIELDS * LATENT_DIM                                   # 64 (concat aggregate)
FIELD_OFFSETS = tuple(int(sum(FIELD_VOCAB_SIZES[:f])) for f in range(NUM_FIELDS))
TOTAL_VOCAB = int(sum(FIELD_VOCAB_SIZES))                      # 110
PADDED_VOCAB = ((TOTAL_VOCAB + 127) // 128) * 128              # 128 -> MXU-aligned K


def _round_up(x, m):
    return ((x + m - 1) // m) * m


# ----------------------------------------------------------------------------
# Pallas kernel: fused (embedding lookup + concat + Linear1 + BN) -> ReLU
#                -> (Linear2 + BN) -> ReLU -> Linear3, all transposed.
# ----------------------------------------------------------------------------
def _dnn_kernel(ids_ref, w1t_ref, b1t_ref, w2t_ref, b2t_ref, w3c_ref, b3_ref,
                o_ref):
    tb = ids_ref.shape[1]

    # --- multihot^T (PADDED_VOCAB, tb): offsets pre-added on host; the fields'
    #     vocab ranges are disjoint, so boolean OR + one cast is exact. ---
    ids = ids_ref[...]                                          # (F, tb) global ids
    vocab = jax.lax.broadcasted_iota(jnp.int32, (PADDED_VOCAB, tb), 0)
    hot = ids[0:1, :] == vocab
    for f in range(1, NUM_FIELDS):
        hot = hot | (ids[f:f + 1, :] == vocab)
    mh_t = hot.astype(jnp.float32)                              # single cast

    # --- fused lookup+concat+Linear1(+BN) then ReLU:  (h1, 128) @ (128, tb) ---
    h1 = jnp.dot(w1t_ref[...], mh_t, preferred_element_type=jnp.float32)
    h1 = jnp.maximum(h1 + b1t_ref[...], 0.0)                    # (h1, tb)

    # --- Linear2(+BN) -> ReLU:  (h2, h1) @ (h1, tb) ---
    h2 = jnp.dot(w2t_ref[...], h1, preferred_element_type=jnp.float32)
    h2 = jnp.maximum(h2 + b2t_ref[...], 0.0)                    # (h2, tb)

    # --- Final Linear(h2, 1): VPU multiply + sublane reduction -> (1, tb) ---
    out = jnp.sum(h2 * w3c_ref[...], axis=0, keepdims=True) + b3_ref[...]
    o_ref[...] = out.astype(o_ref.dtype)                        # lane-dense store


def _dnn_pallas(ids_t, w1t, b1t, w2t, b2t, w3c, b3k, *, tile_b):
    """ids_t: (NUM_FIELDS, padded_B) int32, padded_B % tile_b == 0."""
    nfields, padded_b = ids_t.shape
    grid = (padded_b // tile_b,)

    def resident(arr):
        # Full-array block, constant index_map -> DMA'd once, reused every step.
        return pl.BlockSpec(arr.shape, lambda i: (0, 0))

    return pl.pallas_call(
        _dnn_kernel,
        out_shape=jax.ShapeDtypeStruct((1, padded_b), jnp.float32),
        grid_spec=pltpu.PrefetchScalarGridSpec(
            num_scalar_prefetch=0,
            grid=grid,
            in_specs=[
                pl.BlockSpec((nfields, tile_b), lambda i: (0, i)),  # streamed ids
                resident(w1t), resident(b1t),
                resident(w2t), resident(b2t),
                resident(w3c), resident(b3k),
            ],
            out_specs=pl.BlockSpec((1, tile_b), lambda i: (0, i)),  # lane-dense
        ),
        compiler_params=pltpu.CompilerParams(
            # Batch tiles are independent -> shard grid across TCs (v7x megacore).
            dimension_semantics=("parallel",),
        ),
    )(ids_t, w1t, b1t, w2t, b2t, w3c, b3k)


# ----------------------------------------------------------------------------
# Parameter construction (deterministic) + BN folding + table/w1 fusion
# ----------------------------------------------------------------------------
def make_params(key):
    hidden_dims = []
    cur = D0
    for f in HIDDEN_DIMS_FRACTOR:
        hidden_dims.append(int(cur * f))
        cur = hidden_dims[-1]
    h1, h2 = hidden_dims                       # 32, 16

    keys = jax.random.split(key, NUM_FIELDS + 3)
    emb_tables = [
        0.05 * jax.random.normal(keys[i], (v, LATENT_DIM), jnp.float32)
        for i, v in enumerate(FIELD_VOCAB_SIZES)
    ]

    def linear(k, din, dout):
        lim = 1.0 / float(din) ** 0.5
        kw, kb = jax.random.split(k)
        w = jax.random.uniform(kw, (din, dout), jnp.float32, -lim, lim)
        b = jax.random.uniform(kb, (1, dout), jnp.float32, -lim, lim)
        return w, b

    w1, b1 = linear(keys[NUM_FIELDS + 0], D0, h1)
    w2, b2 = linear(keys[NUM_FIELDS + 1], h1, h2)
    w3, b3 = linear(keys[NUM_FIELDS + 2], h2, 1)

    # BatchNorm1d eval with default stats (mean=0, var=1, gamma=1, beta=0):
    #   y = (Wx + b) / sqrt(1 + eps)  -> fold scale into the preceding linear.
    # TODO(synk): with a trained checkpoint, fold the actual running stats/affine.
    bn_s = 1.0 / jnp.sqrt(1.0 + BN_EPS)

    # Block-diagonal combined embedding table (PADDED_VOCAB, D0):
    #   multihot @ tbl == concat_f(emb_f[id_f]) exactly.  There is no nonlinearity
    #   before Linear1, so fold the table into w1:  tbl_w1 = tbl @ (w1 * bn_s).
    tbl = jnp.zeros((PADDED_VOCAB, D0), jnp.float32)
    for f, emb in enumerate(emb_tables):
        off = FIELD_OFFSETS[f]
        tbl = tbl.at[off:off + emb.shape[0],
                     f * LATENT_DIM:(f + 1) * LATENT_DIM].set(emb)
    tbl_w1 = tbl @ (w1 * bn_s)                 # (128, h1)

    return dict(
        # raw params (reference path)
        emb=emb_tables, w1=w1, b1=b1, w2=w2, b2=b2, w3=w3, b3=b3,
        # kernel params (transposed / folded / fused)
        offs_vec=jnp.array(FIELD_OFFSETS, dtype=jnp.int32),   # (F,)
        w1t=tbl_w1.T,                          # (h1, 128)
        b1t=(b1 * bn_s).T,                     # (h1, 1)
        w2t=(w2 * bn_s).T,                     # (h2, h1)
        b2t=(b2 * bn_s).T,                     # (h2, 1)
        w3c=w3,                                # (h2, 1)
        b3k=b3,                                # (1, 1)
    )


# ----------------------------------------------------------------------------
# Full model forward
# ----------------------------------------------------------------------------
@functools.partial(jax.jit, static_argnames=("tile_b",))
def dnn_youtube_forward(params, field_ids, tile_b=4096):
    """field_ids: (B, NUM_FIELDS) int32 categorical indices -> (B, 1) logits."""
    B = field_ids.shape[0]

    # Batch lives on the 128-lane axis -> tile must be a multiple of 128.
    req = max(128, _round_up(int(tile_b), 128))
    padded0 = _round_up(B, 128)
    if padded0 <= 128:
        tb = 128
    else:
        # Keep the grid >= 2 steps whenever possible (v7x has 2 TensorCores),
        # while keeping tiles as big as requested (amortizes ~0.35us/step overhead).
        half = _round_up(-(-padded0 // 2), 128)
        tb = min(req, half)
    padded_b = _round_up(B, tb)
    # At tile_b<=4096 the biggest intermediate (multihot, 128 x tb f32 = 2 MiB)
    # fits the default scoped-VMEM limit on v5e/v6e/v7x; no vmem_limit override needed.

    # Pre-add field offsets on the host (removes a per-tile VPU add + one input).
    ids = field_ids.astype(jnp.int32) + params["offs_vec"][None, :]
    if padded_b != B:
        ids = jnp.pad(ids, ((0, padded_b - B), (0, 0)), constant_values=-1)
    ids_t = ids.T                                               # (F, padded_b)

    out = _dnn_pallas(ids_t,
                      params["w1t"], params["b1t"],
                      params["w2t"], params["b2t"],
                      params["w3c"], params["b3k"],
                      tile_b=tb)                                # (1, padded_b)
    return out[0, :B].reshape(B, 1)
    # TODO(synk): Dropout(train) / BatchNorm running-stat updates are train-mode
    # only; eval-mode semantics (identity / folded affine) are implemented.


# ----------------------------------------------------------------------------
# Reference (pure JAX) for sanity check — mirrors the PyTorch module in eval mode.
# ----------------------------------------------------------------------------
def reference_forward(params, field_ids):
    bn_s = 1.0 / jnp.sqrt(1.0 + BN_EPS)
    embs = [params["emb"][f][field_ids[:, f]] for f in range(NUM_FIELDS)]
    x = jnp.concatenate(embs, axis=-1)
    h = jnp.maximum((x @ params["w1"] + params["b1"]) * bn_s, 0.0)
    h = jnp.maximum((h @ params["w2"] + params["b2"]) * bn_s, 0.0)
    return h @ params["w3"] + params["b3"]


if __name__ == "__main__":
    key = jax.random.PRNGKey(0)
    kp, kd = jax.random.split(key)
    params = make_params(kp)

    B = 64
    # deterministic synthetic categorical "data": one index per field per sample
    maxvals = jnp.array(FIELD_VOCAB_SIZES, dtype=jnp.int32)
    field_ids = (jax.random.randint(kd, (B, NUM_FIELDS), 0, 1 << 20) % maxvals).astype(jnp.int32)

    out = dnn_youtube_forward(params, field_ids)
    out = jax.block_until_ready(out)

    ref = reference_forward(params, field_ids)
    assert out.shape == (B, 1), out.shape
    assert jnp.allclose(out, ref, atol=1e-4, rtol=1e-4), (out, ref)
    print("KERNEL_OK")
</pallas_src>

<mosaic_0001>
module attributes {stable_mosaic.version = 11 : i64} {
  func.func @_dnn_kernel(%arg0: i32, %arg1: memref<4x128xi32, #tpu.memory_space<vmem>>, %arg2: memref<32x128xf32, #tpu.memory_space<vmem>>, %arg3: memref<32x1xf32, #tpu.memory_space<vmem>>, %arg4: memref<16x32xf32, #tpu.memory_space<vmem>>, %arg5: memref<16x1xf32, #tpu.memory_space<vmem>>, %arg6: memref<16x1xf32, #tpu.memory_space<vmem>>, %arg7: memref<1x1xf32, #tpu.memory_space<vmem>>, %arg8: memref<1x128xf32, #tpu.memory_space<vmem>>) attributes {dimension_semantics = [#tpu.dimension_semantics<parallel>], iteration_bounds = array<i64: 1>, scalar_prefetch = 0 : i64, scratch_operands = 0 : i64, tpu.core_type = #tpu.core_type<tc>, window_params = [{transform_indices = @transform_0, window_bounds = array<i64: 4, 128>}, {pipeline_mode = #tpu.pipeline_mode<synchronous>, transform_indices = @transform_1, window_bounds = array<i64: 32, 128>}, {pipeline_mode = #tpu.pipeline_mode<synchronous>, transform_indices = @transform_2, window_bounds = array<i64: 32, 1>}, {pipeline_mode = #tpu.pipeline_mode<synchronous>, transform_indices = @transform_3, window_bounds = array<i64: 16, 32>}, {pipeline_mode = #tpu.pipeline_mode<synchronous>, transform_indices = @transform_4, window_bounds = array<i64: 16, 1>}, {pipeline_mode = #tpu.pipeline_mode<synchronous>, transform_indices = @transform_5, window_bounds = array<i64: 16, 1>}, {pipeline_mode = #tpu.pipeline_mode<synchronous>, transform_indices = @transform_6, window_bounds = array<i64: 1, 1>}, {transform_indices = @transform_7, window_bounds = array<i64: 1, 128>}]} {
    %c0 = arith.constant 0 : index
    %c0_0 = arith.constant 0 : index
    %0 = vector.load %arg1[%c0, %c0_0] : memref<4x128xi32, #tpu.memory_space<vmem>>, vector<4x128xi32>
    %1 = tpu.iota {dimensions = array<i32: 0>} : vector<128x128xi32>
    %2 = vector.extract_strided_slice %0 {offsets = [0, 0], sizes = [1, 128], strides = [1, 1]} : vector<4x128xi32> to vector<1x128xi32>
    %3 = vector.broadcast %2 : vector<1x128xi32> to vector<128x128xi32>
    %4 = arith.cmpi eq, %3, %1 : vector<128x128xi32>
    %5 = vector.extract_strided_slice %0 {offsets = [1, 0], sizes = [1, 128], strides = [1, 1]} : vector<4x128xi32> to vector<1x128xi32>
    %6 = vector.broadcast %5 : vector<1x128xi32> to vector<128x128xi32>
    %7 = arith.cmpi eq, %6, %1 : vector<128x128xi32>
    %8 = arith.ori %4, %7 : vector<128x128xi1>
    %9 = vector.extract_strided_slice %0 {offsets = [2, 0], sizes = [1, 128], strides = [1, 1]} : vector<4x128xi32> to vector<1x128xi32>
    %10 = vector.broadcast %9 : vector<1x128xi32> to vector<128x128xi32>
    %11 = arith.cmpi eq, %10, %1 : vector<128x128xi32>
    %12 = arith.ori %8, %11 : vector<128x128xi1>
    %13 = vector.extract_strided_slice %0 {offsets = [3, 0], sizes = [1, 128], strides = [1, 1]} : vector<4x128xi32> to vector<1x128xi32>
    %14 = vector.broadcast %13 : vector<1x128xi32> to vector<128x128xi32>
    %15 = arith.cmpi eq, %14, %1 : vector<128x128xi32>
    %16 = arith.ori %12, %15 : vector<128x128xi1>
    %17 = arith.extui %16 : vector<128x128xi1> to vector<128x128xi32>
    %18 = arith.sitofp %17 : vector<128x128xi32> to vector<128x128xf32>
    %c0_1 = arith.constant 0 : index
    %c0_2 = arith.constant 0 : index
    %19 = vector.load %arg2[%c0_1, %c0_2] : memref<32x128xf32, #tpu.memory_space<vmem>>, vector<32x128xf32>
    %cst = arith.constant dense<0.000000e+00> : vector<32x128xf32>
    %20 = tpu.matmul %19, %18, %cst {dimension_numbers = #tpu.dot_dimension_numbers<[1], [0], [0], [1], [0, 0, 1, 1], [], []>} : vector<32x128xf32>, vector<128x128xf32>, vector<32x128xf32> -> vector<32x128xf32>
    %c0_3 = arith.constant 0 : index
    %c0_4 = arith.constant 0 : index
    %21 = vector.load %arg3[%c0_3, %c0_4] : memref<32x1xf32, #tpu.memory_space<vmem>>, vector<32x1xf32>
    %22 = vector.broadcast %21 : vector<32x1xf32> to vector<32x128xf32>
    %23 = arith.addf %20, %22 : vector<32x128xf32>
    %cst_5 = arith.constant 0.000000e+00 : f32
    %24 = vector.broadcast %cst_5 : f32 to vector<32x128xf32>
    %25 = arith.maximumf %23, %24 : vector<32x128xf32>
    %c0_6 = arith.constant 0 : index
    %c0_7 = arith.constant 0 : index
    %26 = vector.load %arg4[%c0_6, %c0_7] : memref<16x32xf32, #tpu.memory_space<vmem>>, vector<16x32xf32>
    %cst_8 = arith.constant dense<0.000000e+00> : vector<16x128xf32>
    %27 = tpu.matmul %26, %25, %cst_8 {dimension_numbers = #tpu.dot_dimension_numbers<[1], [0], [0], [1], [0, 0, 1, 1], [], []>} : vector<16x32xf32>, vector<32x128xf32>, vector<16x128xf32> -> vector<16x128xf32>
    %c0_9 = arith.constant 0 : index
    %c0_10 = arith.constant 0 : index
    %28 = vector.load %arg5[%c0_9, %c0_10] : memref<16x1xf32, #tpu.memory_space<vmem>>, vector<16x1xf32>
    %29 = vector.broadcast %28 : vector<16x1xf32> to vector<16x128xf32>
    %30 = arith.addf %27, %29 : vector<16x128xf32>
    %cst_11 = arith.constant 0.000000e+00 : f32
    %31 = vector.broadcast %cst_11 : f32 to vector<16x128xf32>
    %32 = arith.maximumf %30, %31 : vector<16x128xf32>
    %c0_12 = arith.constant 0 : index
    %c0_13 = arith.constant 0 : index
    %33 = vector.load %arg6[%c0_12, %c0_13] : memref<16x1xf32, #tpu.memory_space<vmem>>, vector<16x1xf32>
    %34 = vector.broadcast %33 : vector<16x1xf32> to vector<16x128xf32>
    %35 = arith.mulf %32, %34 : vector<16x128xf32>
    %cst_14 = arith.constant dense<0.000000e+00> : vector<128xf32>
    %36 = vector.multi_reduction <add>, %35, %cst_14 [0] : vector<16x128xf32> to vector<128xf32>
    %37 = vector.shape_cast %36 : vector<128xf32> to vector<1x128xf32>
    %c0_15 = arith.constant 0 : index
    %c0_16 = arith.constant 0 : index
    %38 = vector.load %arg7[%c0_15, %c0_16] : memref<1x1xf32, #tpu.memory_space<vmem>>, vector<1x1xf32>
    %39 = vector.broadcast %38 : vector<1x1xf32> to vector<1x128xf32>
    %40 = arith.addf %37, %39 : vector<1x128xf32>
    %c0_17 = arith.constant 0 : index
    %c0_18 = arith.constant 0 : index
    %41 = vector.load %arg8[%c0_17, %c0_18] : memref<1x128xf32, #tpu.memory_space<vmem>>, vector<1x128xf32>
    tpu.vector_store %arg8[%c0_17, %c0_18], %40 {strides = array<i32>} : memref<1x128xf32, #tpu.memory_space<vmem>>, vector<1x128xf32>,
    return
  }
  func.func @transform_0(%arg0: i32) -> (i32, i32) {
    %c0_i32 = arith.constant 0 : i32
    %c0_i32_0 = arith.constant 0 : i32
    return %c0_i32, %arg0 : i32, i32
  }
  func.func @transform_1(%arg0: i32) -> (i32, i32) {
    %c0_i32 = arith.constant 0 : i32
    %c0_i32_0 = arith.constant 0 : i32
    %c0_i32_1 = arith.constant 0 : i32
    return %c0_i32, %c0_i32_0 : i32, i32
  }
  func.func @transform_2(%arg0: i32) -> (i32, i32) {
    %c0_i32 = arith.constant 0 : i32
    %c0_i32_0 = arith.constant 0 : i32
    %c0_i32_1 = arith.constant 0 : i32
    return %c0_i32, %c0_i32_0 : i32, i32
  }
  func.func @transform_3(%arg0: i32) -> (i32, i32) {
    %c0_i32 = arith.constant 0 : i32
    %c0_i32_0 = arith.constant 0 : i32
    %c0_i32_1 = arith.constant 0 : i32
    return %c0_i32, %c0_i32_0 : i32, i32
  }
  func.func @transform_4(%arg0: i32) -> (i32, i32) {
    %c0_i32 = arith.constant 0 : i32
    %c0_i32_0 = arith.constant 0 : i32
    %c0_i32_1 = arith.constant 0 : i32
    return %c0_i32, %c0_i32_0 : i32, i32
  }
  func.func @transform_5(%arg0: i32) -> (i32, i32) {
    %c0_i32 = arith.constant 0 : i32
    %c0_i32_0 = arith.constant 0 : i32
    %c0_i32_1 = arith.constant 0 : i32
    return %c0_i32, %c0_i32_0 : i32, i32
  }
  func.func @transform_6(%arg0: i32) -> (i32, i32) {
    %c0_i32 = arith.constant 0 : i32
    %c0_i32_0 = arith.constant 0 : i32
    %c0_i32_1 = arith.constant 0 : i32
    return %c0_i32, %c0_i32_0 : i32, i32
  }
  func.func @transform_7(%arg0: i32) -> (i32, i32) {
    %c0_i32 = arith.constant 0 : i32
    %c0_i32_0 = arith.constant 0 : i32
    return %c0_i32, %arg0 : i32, i32
  }
}

</mosaic_0001>

<llo_original>
// kernel: dnn_youtube_forward.1
$region0: #{dnn_youtube_forward.1}
  #allocation0 [shape = 'u32[]', space=smem, size = 0x4, offset = 0x4, fixed_abs, tag = 'smem constant byte address 0x4 - core index']
  #allocation1 [shape = 'u32[144,128]{1,0:T(1,128)}', space=vmem, size = 0x12000, scoped, tag = 'internal scratch']
  #allocation2 [shape = 'f32[1,1]{1,0:T(1,128)S(1)}', space=vmem, size = 0x200, scoped, tag = 'scoped memory for dnn_youtube_forward.1']
  %s0 = inlined_call_operand.vmem [shape: s32[4,128], index: 0, kind: input, shape index: {}]
  %s1 = inlined_call_operand.vmem [shape: f32[32,128], index: 1, kind: input, shape index: {}]
  %s2 = inlined_call_operand.vmem [shape: f32[32,1], index: 2, kind: input, shape index: {}]
  %s3 = inlined_call_operand.vmem [shape: f32[16,32], index: 3, kind: input, shape index: {}]
  %s4 = inlined_call_operand.vmem [shape: f32[16,1], index: 4, kind: input, shape index: {}]
  %s5 = inlined_call_operand.vmem [shape: f32[16,1], index: 5, kind: input, shape index: {}]
  %s6 = inlined_call_operand.<no memory space> [shape: f32[1,1], index: 6, kind: input, shape index: {}]
  %s7 = inlined_call_operand.vmem [shape: f32[1,128], index: 7, kind: output, shape index: {}]
  %s8 = sld [smem:[#allocation0]]
  $region38: #{dnn_youtube_forward.1} parent=0
    _
  %s10 = ssub.s32 1, %s8
  %s11 = scalar_select 0, %s10, %s8
  %v12 = vstv %s6
  %13 = vst [vmem:[#allocation2] sm:$0x1] %v12
  // Predicated region
  $region2: #{dnn_youtube_forward.1} parent=0 // pred_check
    _
  $region3: #{dnn_youtube_forward.1} parent=0 // pred_check_branch
    %15 = sbr.rel (0) target = $region5
  $region4: #{dnn_youtube_forward.1} parent=0 // pred_region
    _
  $region5: #{dnn_youtube_forward.1} parent=0 // pred_fallthru
    _
  // Predicated region
  $region6: #{dnn_youtube_forward.1} parent=0 // pred_check
    _
  $region7: #{dnn_youtube_forward.1} parent=0 // pred_check_branch
    %17 = sbr.rel (0) target = $region9
  $region8: #{dnn_youtube_forward.1} parent=0 // pred_region
    _
  $region9: #{dnn_youtube_forward.1} parent=0 // pred_fallthru
    _
  // Predicated region
  $region10: #{dnn_youtube_forward.1} parent=0 // pred_check
    _
  $region11: #{dnn_youtube_forward.1} parent=0 // pred_check_branch
    %19 = sbr.rel (0) target = $region13
  $region12: #{dnn_youtube_forward.1} parent=0 // pred_region
    _
  $region13: #{dnn_youtube_forward.1} parent=0 // pred_fallthru
    _
  // Predicated region
  $region14: #{dnn_youtube_forward.1} parent=0 // pred_check
    _
  $region15: #{dnn_youtube_forward.1} parent=0 // pred_check_branch
    %21 = sbr.rel (0) target = $region17
  $region16: #{dnn_youtube_forward.1} parent=0 // pred_region
    _
  $region17: #{dnn_youtube_forward.1} parent=0 // pred_fallthru
    _
  // Predicated region
  $region18: #{dnn_youtube_forward.1} parent=0 // pred_check
    _
  $region19: #{dnn_youtube_forward.1} parent=0 // pred_check_branch
    %23 = sbr.rel (0) target = $region21
  $region20: #{dnn_youtube_forward.1} parent=0 // pred_region
    _
  $region21: #{dnn_youtube_forward.1} parent=0 // pred_fallthru
    _
  // Predicated region
  $region22: #{dnn_youtube_forward.1} parent=0 // pred_check
    _
  $region23: #{dnn_youtube_forward.1} parent=0 // pred_check_branch
    %25 = sbr.rel (0) target = $region25
  $region24: #{dnn_youtube_forward.1} parent=0 // pred_region
    _
  $region25: #{dnn_youtube_forward.1} parent=0 // pred_fallthru
    _
  // Predicated region
  $region26: #{dnn_youtube_forward.1} parent=0 // pred_check
    _
  $region27: #{dnn_youtube_forward.1} parent=0 // pred_check_branch
    %27 = sbr.rel (0) target = $region29
  $region28: #{dnn_youtube_forward.1} parent=0 // pred_region
    _
  $region29: #{dnn_youtube_forward.1} parent=0 // pred_fallthru
    _
  %v28 = vld [vmem:[%s0] sm:$0xf]
  %v29 = vlaneseq
  %v30 = vshrl.u32 %v29, 7
  %v31 = vadd.s32 %v30, 8
  %v32 = vadd.s32 %v30, 16
  %v33 = vadd.s32 %v30, 24
  %v34 = vadd.s32 %v30, 32
  %v35 = vadd.s32 %v30, 40
  %v36 = vadd.s32 %v30, 48
  %v37 = vadd.s32 %v30, 56
  %v38 = vadd.s32 %v30, 64
  %v39 = vadd.s32 %v30, 72
  %v40 = vadd.s32 %v30, 80
  %v41 = vadd.s32 %v30, 88
  %v42 = vadd.s32 %v30, 96
  %v43 = vadd.s32 %v30, 104
  %v44 = vadd.s32 %v30, 112
  %v45 = vadd.s32 %v30, 120
  %v46 = vlaneseq
  %v47 = vshrl.u32 %v46, 7
  %v48 = vsub.s32 0, %v47
  %v49 = vrot.slane %v28, %v48
  %vm50 = vcmp.eq.s32.totalorder %v49, %v30
  %vm51 = vcmp.eq.s32.totalorder %v49, %v31
  %vm52 = vcmp.eq.s32.totalorder %v49, %v32
  %vm53 = vcmp.eq.s32.totalorder %v49, %v33
  %vm54 = vcmp.eq.s32.totalorder %v49, %v34
  %vm55 = vcmp.eq.s32.totalorder %v49, %v35
  %vm56 = vcmp.eq.s32.totalorder %v49, %v36
  %vm57 = vcmp.eq.s32.totalorder %v49, %v37
  %vm58 = vcmp.eq.s32.totalorder %v49, %v38
  %vm59 = vcmp.eq.s32.totalorder %v49, %v39
  %vm60 = vcmp.eq.s32.totalorder %v49, %v40
  %vm61 = vcmp.eq.s32.totalorder %v49, %v41
  %vm62 = vcmp.eq.s32.totalorder %v49, %v42
  %vm63 = vcmp.eq.s32.totalorder %v49, %v43
  %vm64 = vcmp.eq.s32.totalorder %v49, %v44
  %vm65 = vcmp.eq.s32.totalorder %v49, %v45
  %v66 = vlaneseq
  %v67 = vshrl.u32 %v66, 7
  %v68 = vsub.s32 1, %v67
  %v69 = vrot.slane %v28, %v68
  %vm70 = vcmp.eq.s32.totalorder %v69, %v30
  %vm71 = vcmp.eq.s32.totalorder %v69, %v31
  %vm72 = vcmp.eq.s32.totalorder %v69, %v32
  %vm73 = vcmp.eq.s32.totalorder %v69, %v33
  %vm74 = vcmp.eq.s32.totalorder %v69, %v34
  %vm75 = vcmp.eq.s32.totalorder %v69, %v35
  %vm76 = vcmp.eq.s32.totalorder %v69, %v36
  %vm77 = vcmp.eq.s32.totalorder %v69, %v37
  %vm78 = vcmp.eq.s32.totalorder %v69, %v38
  %vm79 = vcmp.eq.s32.totalorder %v69, %v39
  %vm80 = vcmp.eq.s32.totalorder %v69, %v40
  %vm81 = vcmp.eq.s32.totalorder %v69, %v41
  %vm82 = vcmp.eq.s32.totalorder %v69, %v42
  %vm83 = vcmp.eq.s32.totalorder %v69, %v43
  %vm84 = vcmp.eq.s32.totalorder %v69, %v44
  %vm85 = vcmp.eq.s32.totalorder %v69, %v45
  %vm86 = vmor %vm50, %vm70
  %vm87 = vmor %vm51, %vm71
  %vm88 = vmor %vm52, %vm72
  %vm89 = vmor %vm53, %vm73
  %vm90 = vmor %vm54, %vm74
  %vm91 = vmor %vm55, %vm75
  %vm92 = vmor %vm56, %vm76
  %vm93 = vmor %vm57, %vm77
  %vm94 = vmor %vm58, %vm78
  %vm95 = vmor %vm59, %vm79
  %vm96 = vmor %vm60, %vm80
  %vm97 = vmor %vm61, %vm81
  %vm98 = vmor %vm62, %vm82
  %vm99 = vmor %vm63, %vm83
  %vm100 = vmor %vm64, %vm84
  %vm101 = vmor %vm65, %vm85
  %v102 = vlaneseq
  %v103 = vshrl.u32 %v102, 7
  %v104 = vsub.s32 2, %v103
  %v105 = vrot.slane %v28, %v104
  %vm106 = vcmp.eq.s32.totalorder %v105, %v30
  %vm107 = vcmp.eq.s32.totalorder %v105, %v31
  %vm108 = vcmp.eq.s32.totalorder %v105, %v32
  %vm109 = vcmp.eq.s32.totalorder %v105, %v33
  %vm110 = vcmp.eq.s32.totalorder %v105, %v34
  %vm111 = vcmp.eq.s32.totalorder %v105, %v35
  %vm112 = vcmp.eq.s32.totalorder %v105, %v36
  %vm113 = vcmp.eq.s32.totalorder %v105, %v37
  %vm114 = vcmp.eq.s32.totalorder %v105, %v38
  %vm115 = vcmp.eq.s32.totalorder %v105, %v39
  %vm116 = vcmp.eq.s32.totalorder %v105, %v40
  %vm117 = vcmp.eq.s32.totalorder %v105, %v41
  %vm118 = vcmp.eq.s32.totalorder %v105, %v42
  %vm119 = vcmp.eq.s32.totalorder %v105, %v43
  %vm120 = vcmp.eq.s32.totalorder %v105, %v44
  %vm121 = vcmp.eq.s32.totalorder %v105, %v45
  %vm122 = vmor %vm86, %vm106
  %vm123 = vmor %vm87, %vm107
  %vm124 = vmor %vm88, %vm108
  %vm125 = vmor %vm89, %vm109
  %vm126 = vmor %vm90, %vm110
  %vm127 = vmor %vm91, %vm111
  %vm128 = vmor %vm92, %vm112
  %vm129 = vmor %vm93, %vm113
  %vm130 = vmor %vm94, %vm114
  %vm131 = vmor %vm95, %vm115
  %vm132 = vmor %vm96, %vm116
  %vm133 = vmor %vm97, %vm117
  %vm134 = vmor %vm98, %vm118
  %vm135 = vmor %vm99, %vm119
  %vm136 = vmor %vm100, %vm120
  %vm137 = vmor %vm101, %vm121
  %v138 = vlaneseq
  %v139 = vshrl.u32 %v138, 7
  %v140 = vsub.s32 3, %v139
  %v141 = vrot.slane %v28, %v140
  %vm142 = vcmp.eq.s32.totalorder %v141, %v30
  %vm143 = vcmp.eq.s32.totalorder %v141, %v31
  %vm144 = vcmp.eq.s32.totalorder %v141, %v32
  %vm145 = vcmp.eq.s32.totalorder %v141, %v33
  %vm146 = vcmp.eq.s32.totalorder %v141, %v34
  %vm147 = vcmp.eq.s32.totalorder %v141, %v35
  %vm148 = vcmp.eq.s32.totalorder %v141, %v36
  %vm149 = vcmp.eq.s32.totalorder %v141, %v37
  %vm150 = vcmp.eq.s32.totalorder %v141, %v38
  %vm151 = vcmp.eq.s32.totalorder %v141, %v39
  %vm152 = vcmp.eq.s32.totalorder %v141, %v40
  %vm153 = vcmp.eq.s32.totalorder %v141, %v41
  %vm154 = vcmp.eq.s32.totalorder %v141, %v42
  %vm155 = vcmp.eq.s32.totalorder %v141, %v43
  %vm156 = vcmp.eq.s32.totalorder %v141, %v44
  %vm157 = vcmp.eq.s32.totalorder %v141, %v45
  %vm158 = vmor %vm122, %vm142
  %vm159 = vmor %vm123, %vm143
  %vm160 = vmor %vm124, %vm144
  %vm161 = vmor %vm125, %vm145
  %vm162 = vmor %vm126, %vm146
  %vm163 = vmor %vm127, %vm147
  %vm164 = vmor %vm128, %vm148
  %vm165 = vmor %vm129, %vm149
  %vm166 = vmor %vm130, %vm150
  %vm167 = vmor %vm131, %vm151
  %vm168 = vmor %vm132, %vm152
  %vm169 = vmor %vm133, %vm153
  %vm170 = vmor %vm134, %vm154
  %vm171 = vmor %vm135, %vm155
  %vm172 = vmor %vm136, %vm156
  %vm173 = vmor %vm137, %vm157
  %v174 = vsel %vm158, 1, 0
  %v175 = vsel %vm159, 1, 0
  %v176 = vsel %vm160, 1, 0
  %v177 = vsel %vm161, 1, 0
  %v178 = vsel %vm162, 1, 0
  %v179 = vsel %vm163, 1, 0
  %v180 = vsel %vm164, 1, 0
  %v181 = vsel %vm165, 1, 0
  %v182 = vsel %vm166, 1, 0
  %v183 = vsel %vm167, 1, 0
  %v184 = vsel %vm168, 1, 0
  %v185 = vsel %vm169, 1, 0
  %v186 = vsel %vm170, 1, 0
  %v187 = vsel %vm171, 1, 0
  %v188 = vsel %vm172, 1, 0
  %v189 = vsel %vm173, 1, 0
  %v190 = vcvt.s32.f32 %v174
  %v191 = vcvt.s32.f32 %v175
  %v192 = vcvt.s32.f32 %v176
  %v193 = vcvt.s32.f32 %v177
  %v194 = vcvt.s32.f32 %v178
  %v195 = vcvt.s32.f32 %v179
  %v196 = vcvt.s32.f32 %v180
  %v197 = vcvt.s32.f32 %v181
  %v198 = vcvt.s32.f32 %v182
  %v199 = vcvt.s32.f32 %v183
  %v200 = vcvt.s32.f32 %v184
  %v201 = vcvt.s32.f32 %v185
  %v202 = vcvt.s32.f32 %v186
  %v203 = vcvt.s32.f32 %v187
  %v204 = vcvt.s32.f32 %v188
  %v205 = vcvt.s32.f32 %v189
  %v206 = vld [vmem:[%s1] sm:$0xff]
  %v207 = vld [vmem:[%s1 + $0x8] sm:$0xff]
  %v208 = vld [vmem:[%s1 + $0x10] sm:$0xff]
  %v209 = vld [vmem:[%s1 + $0x18] sm:$0xff]
  %v210 = vld [vmem:[%s2] sm:$0xff]
  %v211 = vld [vmem:[%s2 + $0x8] sm:$0xff]
  %v212 = vld [vmem:[%s2 + $0x10] sm:$0xff]
  %v213 = vld [vmem:[%s2 + $0x18] sm:$0xff]
  %215 = vset.pattern.permute.xlu0 0
  %216 = vperm.xlu0 %215, %v210
  %v217 = vpop.permute.xlu0 %216
  %220 = vset.pattern.permute.xlu0 0
  %221 = vperm.xlu0 %220, %v211
  %v222 = vpop.permute.xlu0 %221
  %225 = vset.pattern.permute.xlu0 0
  %226 = vperm.xlu0 %225, %v212
  %v227 = vpop.permute.xlu0 %226
  %230 = vset.pattern.permute.xlu0 0
  %231 = vperm.xlu0 %230, %v213
  %v232 = vpop.permute.xlu0 %231
  %234 = vmatprep.subr.mxu0 0.0
  %235 = vmatpush1.msra.mxu0 %v205
  %236 = vmatprep.subr.mxu0 0.0
  %237 = vmatpush1.msra.mxu0 %v204
  %238 = vmatprep.subr.mxu0 0.0
  %239 = vmatpush1.msra.mxu0 %v203
  %240 = vmatprep.subr.mxu0 0.0
  %241 = vmatpush1.msra.mxu0 %v202
  %242 = vmatprep.subr.mxu0 0.0
  %243 = vmatpush1.msra.mxu0 %v201
  %244 = vmatprep.subr.mxu0 0.0
  %245 = vmatpush1.msra.mxu0 %v200
  %246 = vmatprep.subr.mxu0 0.0
  %247 = vmatpush1.msra.mxu0 %v199
  %248 = vmatprep.subr.mxu0 0.0
  %249 = vmatpush1.msra.mxu0 %v198
  %250 = vmatprep.subr.mxu0 0.0
  %251 = vmatpush1.msra.mxu0 %v197
  %252 = vmatprep.subr.mxu0 0.0
  %253 = vmatpush1.msra.mxu0 %v196
  %254 = vmatprep.subr.mxu0 0.0
  %255 = vmatpush1.msra.mxu0 %v195
  %256 = vmatprep.subr.mxu0 0.0
  %257 = vmatpush1.msra.mxu0 %v194
  %258 = vmatprep.subr.mxu0 0.0
  %259 = vmatpush1.msra.mxu0 %v193
  %260 = vmatprep.subr.mxu0 0.0
  %261 = vmatpush1.msra.mxu0 %v192
  %262 = vmatprep.subr.mxu0 0.0
  %263 = vmatpush1.msra.mxu0 %v191
  %264 = vmatprep.subr.mxu0 0.0
  %265 = vmatpush1.msra.mxu0 %v190
  %266 = vmatprep.subr.mxu0 0.0
  %267 = vmatpush2.msra.mxu0 0.0
  %268 = vmatprep.subr.mxu0 0.0
  %269 = vmatpush2.msra.mxu0 0.0
  %270 = vmatprep.subr.mxu0 0.0
  %271 = vmatpush2.msra.mxu0 0.0
  %272 = vmatprep.subr.mxu0 0.0
  %273 = vmatpush2.msra.mxu0 0.0
  %274 = vmatprep.subr.mxu0 0.0
  %275 = vmatpush2.msra.mxu0 0.0
  %276 = vmatprep.subr.mxu0 0.0
  %277 = vmatpush2.msra.mxu0 0.0
  %278 = vmatprep.subr.mxu0 0.0
  %279 = vmatpush2.msra.mxu0 0.0
  %280 = vmatprep.subr.mxu0 0.0
  %281 = vmatpush2.msra.mxu0 0.0
  %282 = vmatprep.subr.mxu0 0.0
  %283 = vmatpush2.msra.mxu0 0.0
  %284 = vmatprep.subr.mxu0 0.0
  %285 = vmatpush2.msra.mxu0 0.0
  %286 = vmatprep.subr.mxu0 0.0
  %287 = vmatpush2.msra.mxu0 0.0
  %288 = vmatprep.subr.mxu0 0.0
  %289 = vmatpush2.msra.mxu0 0.0
  %290 = vmatprep.subr.mxu0 0.0
  %291 = vmatpush2.msra.mxu0 0.0
  %292 = vmatprep.subr.mxu0 0.0
  %293 = vmatpush2.msra.mxu0 0.0
  %294 = vmatprep.subr.mxu0 0.0
  %295 = vmatpush2.msra.mxu0 0.0
  %296 = vmatprep.subr.mxu0 0.0
  %297 = vmatpush2.msra.mxu0 0.0
  %298 = vmatprep.mubr.f32.mxu0 0.0
  %299 = vmatmul.mubr.f32.gmra.mxu0 %v206
  %v300 = vpop.f32.mrf.mxu0
  %v301 = vadd.f32 %v217, %v300
  %v302 = vpop.f32.mrf.mxu0
  %303 = vmatprep.mubr.f32.mxu0 0.0
  %304 = vmatmul.mubr.f32.gmra.mxu0 %v207
  %v305 = vpop.f32.mrf.mxu0
  %v306 = vadd.f32 %v222, %v305
  %v307 = vpop.f32.mrf.mxu0
  %308 = vmatprep.mubr.f32.mxu0 0.0
  %309 = vmatmul.mubr.f32.gmra.mxu0 %v208
  %v310 = vpop.f32.mrf.mxu0
  %v311 = vadd.f32 %v227, %v310
  %v312 = vpop.f32.mrf.mxu0
  %313 = vmatprep.mubr.f32.mxu0 0.0
  %314 = vmatmul.mubr.f32.gmra.mxu0 %v209
  %v315 = vpop.f32.mrf.mxu0
  %v316 = vadd.f32 %v232, %v315
  %v317 = vpop.f32.mrf.mxu0
  %318 = vdwg.mxu0
  %v319 = vmax.f32 %v301, 0.0
  %v320 = vmax.f32 %v306, 0.0
  %v321 = vmax.f32 %v311, 0.0
  %v322 = vmax.f32 %v316, 0.0
  %v323 = vld [vmem:[%s3] sm:$0xff]
  %v324 = vld [vmem:[%s3 + $0x8] sm:$0xff]
  %v325 = vld [vmem:[%s4] sm:$0xff]
  %v326 = vld [vmem:[%s4 + $0x8] sm:$0xff]
  %328 = vset.pattern.permute.xlu0 0
  %329 = vperm.xlu0 %328, %v325
  %v330 = vpop.permute.xlu0 %329
  %333 = vset.pattern.permute.xlu0 0
  %334 = vperm.xlu0 %333, %v326
  %v335 = vpop.permute.xlu0 %334
  %vm337 = vcmask 261120
  %v339 = vsel %vm337, %v323, 0
  %v342 = vsel %vm337, %v324, 0
  %344 = vmatprep.subr.mxu0 0.0
  %345 = vmatpush1.msra.mxu0 0.0
  %346 = vmatprep.subr.mxu0 0.0
  %347 = vmatpush1.msra.mxu0 0.0
  %348 = vmatprep.subr.mxu0 0.0
  %349 = vmatpush1.msra.mxu0 0.0
  %350 = vmatprep.subr.mxu0 0.0
  %351 = vmatpush1.msra.mxu0 0.0
  %352 = vmatprep.subr.mxu0 0.0
  %353 = vmatpush1.msra.mxu0 0.0
  %354 = vmatprep.subr.mxu0 0.0
  %355 = vmatpush1.msra.mxu0 0.0
  %356 = vmatprep.subr.mxu0 0.0
  %357 = vmatpush1.msra.mxu0 0.0
  %358 = vmatprep.subr.mxu0 0.0
  %359 = vmatpush1.msra.mxu0 0.0
  %360 = vmatprep.subr.mxu0 0.0
  %361 = vmatpush1.msra.mxu0 0.0
  %362 = vmatprep.subr.mxu0 0.0
  %363 = vmatpush1.msra.mxu0 0.0
  %364 = vmatprep.subr.mxu0 0.0
  %365 = vmatpush1.msra.mxu0 0.0
  %366 = vmatprep.subr.mxu0 0.0
  %367 = vmatpush1.msra.mxu0 0.0
  %368 = vmatprep.subr.mxu0 0.0
  %369 = vmatpush1.msra.mxu0 %v322
  %370 = vmatprep.subr.mxu0 0.0
  %371 = vmatpush1.msra.mxu0 %v321
  %372 = vmatprep.subr.mxu0 0.0
  %373 = vmatpush1.msra.mxu0 %v320
  %374 = vmatprep.subr.mxu0 0.0
  %375 = vmatpush1.msra.mxu0 %v319
  %376 = vmatprep.subr.mxu0 0.0
  %377 = vmatpush2.msra.mxu0 0.0
  %378 = vmatprep.subr.mxu0 0.0
  %379 = vmatpush2.msra.mxu0 0.0
  %380 = vmatprep.subr.mxu0 0.0
  %381 = vmatpush2.msra.mxu0 0.0
  %382 = vmatprep.subr.mxu0 0.0
  %383 = vmatpush2.msra.mxu0 0.0
  %384 = vmatprep.subr.mxu0 0.0
  %385 = vmatpush2.msra.mxu0 0.0
  %386 = vmatprep.subr.mxu0 0.0
  %387 = vmatpush2.msra.mxu0 0.0
  %388 = vmatprep.subr.mxu0 0.0
  %389 = vmatpush2.msra.mxu0 0.0
  %390 = vmatprep.subr.mxu0 0.0
  %391 = vmatpush2.msra.mxu0 0.0
  %392 = vmatprep.subr.mxu0 0.0
  %393 = vmatpush2.msra.mxu0 0.0
  %394 = vmatprep.subr.mxu0 0.0
  %395 = vmatpush2.msra.mxu0 0.0
  %396 = vmatprep.subr.mxu0 0.0
  %397 = vmatpush2.msra.mxu0 0.0
  %398 = vmatprep.subr.mxu0 0.0
  %399 = vmatpush2.msra.mxu0 0.0
  %400 = vmatprep.subr.mxu0 0.0
  %401 = vmatpush2.msra.mxu0 0.0
  %402 = vmatprep.subr.mxu0 0.0
  %403 = vmatpush2.msra.mxu0 0.0
  %404 = vmatprep.subr.mxu0 0.0
  %405 = vmatpush2.msra.mxu0 0.0
  %406 = vmatprep.subr.mxu0 0.0
  %407 = vmatpush2.msra.mxu0 0.0
  %408 = vmatprep.mubr.f32.mxu0 0.0
  %409 = vmatmul.mubr.f32.gmra.mxu0 %v339
  %v410 = vpop.f32.mrf.mxu0
  %v411 = vadd.f32 %v330, %v410
  %v412 = vpop.f32.mrf.mxu0
  %413 = vmatprep.mubr.f32.mxu0 0.0
  %414 = vmatmul.mubr.f32.gmra.mxu0 %v342
  %v415 = vpop.f32.mrf.mxu0
  %v416 = vadd.f32 %v335, %v415
  %v417 = vpop.f32.mrf.mxu0
  %418 = vdwg.mxu0
  %v419 = vmax.f32 %v411, 0.0
  %v420 = vmax.f32 %v416, 0.0
  %v421 = vld [vmem:[%s5] sm:$0xff]
  %v422 = vld [vmem:[%s5 + $0x8] sm:$0xff]
  %424 = vset.pattern.permute.xlu0 0
  %425 = vperm.xlu0 %424, %v421
  %v426 = vpop.permute.xlu0 %425
  %429 = vset.pattern.permute.xlu0 0
  %430 = vperm.xlu0 %429, %v422
  %v431 = vpop.permute.xlu0 %430
  %v433 = vmul.f32 %v419, %v426
  %v434 = vmul.f32 %v420, %v431
  %v435 = vadd.f32 %v433, %v434
  %v436 = vrot.slane %v435, 4
  %v437 = vadd.f32 %v435, %v436
  %v438 = vrot.slane %v437, 2
  %v439 = vadd.f32 %v437, %v438
  %v440 = vrot.slane %v439, 1
  %v441 = vadd.f32 %v439, %v440
  %v442 = vld [vmem:[#allocation2] sm:$0x1]
  %444 = vset.pattern.permute.xlu0 0
  %445 = vperm.xlu0 %444, %v442
  %v446 = vpop.permute.xlu0 %445
  %v448 = vlaneseq
  %v449 = vshrl.u32 %v448, 7
  %v450 = vsub.s32 0, %v449
  %v451 = vrot.slane %v446, %v450
  %v452 = vadd.f32 %v441, %v451
  %453 = vst [vmem:[%s7] sm:$0x1] %v452
  // Predicated region
  $region30: #{dnn_youtube_forward.1} parent=0 // pred_check
    _
  $region31: #{dnn_youtube_forward.1} parent=0 // pred_check_branch
    %455 = sbr.rel (0) target = $region33
  $region32: #{dnn_youtube_forward.1} parent=0 // pred_region
    _
  $region33: #{dnn_youtube_forward.1} parent=0 // pred_fallthru
    _
  // Predicated region
  $region34: #{dnn_youtube_forward.1} parent=0 // pred_check
    _
  $region35: #{dnn_youtube_forward.1} parent=0 // pred_check_branch
    %457 = sbr.rel (0) target = $region37
  $region36: #{dnn_youtube_forward.1} parent=0 // pred_region
    _
  $region37: #{dnn_youtube_forward.1} parent=0 // pred_fallthru
    _

</llo_original>
